<compile_context>
chip_gen: v7x
topology: tpu7x:2x2x1
jax: 0.10.0
libtpu: 0.0.40
codegen_flags: <defaults>
</compile_context>

<pallas_src>
import jax
import jax.numpy as jnp
from jax.experimental import pallas as pl
from jax.experimental.pallas import tpu as pltpu

PRE_HORIZON = 10
HIDDEN = 256
OUT_PAD = 128           # lane-dense padded output width (>= PRE_HORIZON)
NEG_SLOPE = 0.01        # nn.LeakyReLU() default
MAX_TB = 512            # batch tile (rows per grid step) for large batches


def _mlp_kernel(x_ref, w1_ref, b1_ref, w2_ref, b2_ref, o_ref):
    # x_ref:  (TB, 256)   f32   VMEM
    # w1_ref: (256, 256)  bf16  VMEM (resident across grid steps)
    # b1_ref: (1, 256)    f32   VMEM
    # w2_ref: (256, 128)  bf16  VMEM (zero-padded beyond col 10)
    # b2_ref: (1, 128)    f32   VMEM (zero-padded beyond col 10)
    # o_ref:  (TB, 128)   f32   VMEM
    x = x_ref[...].astype(jnp.bfloat16)

    # layer1: x @ W1 + b1  (MXU bf16 operands, f32 accumulation)
    h = jnp.dot(x, w1_ref[...], preferred_element_type=jnp.float32)
    h = h + b1_ref[...]

    # layer3: LeakyReLU in f32 (valid since NEG_SLOPE < 1)
    h = jnp.maximum(h, NEG_SLOPE * h)

    # layer2: h @ W2 + b2  (lane-dense 128-wide output)
    out = jnp.dot(h.astype(jnp.bfloat16), w2_ref[...],
                  preferred_element_type=jnp.float32)
    out = out + b2_ref[...]

    o_ref[...] = out.astype(o_ref.dtype)


def personal_out1(x, w1, b1, w2, b2):
    """x: (B, 256) f32 -> (B, 10) f32."""
    B = x.shape[0]

    # --- batch tile: single padded tile for small B, MAX_TB rows otherwise ---
    if B < MAX_TB:
        TB = ((B + 7) // 8) * 8          # pad to sublane multiple, one grid step
    else:
        TB = MAX_TB
    Bp = pl.cdiv(B, TB) * TB
    if Bp != B:
        x = jnp.pad(x, ((0, Bp - B), (0, 0)))  # zero rows -> sliced off below

    # --- bf16 weights (halve weight DMA + native MXU operand dtype) ---
    w1_bf = w1.astype(jnp.bfloat16)
    # --- lane-dense second layer: pad 10 -> 128 output columns with zeros ---
    w2_pad = jnp.zeros((HIDDEN, OUT_PAD), jnp.bfloat16)
    w2_pad = w2_pad.at[:, :PRE_HORIZON].set(w2.astype(jnp.bfloat16))
    b2_pad = jnp.zeros((1, OUT_PAD), jnp.float32)
    b2_pad = b2_pad.at[:, :PRE_HORIZON].set(b2.astype(jnp.float32))
    b1_f32 = b1.astype(jnp.float32).reshape(1, HIDDEN)

    grid = (Bp // TB,)

    cost = pl.CostEstimate(
        flops=2 * Bp * HIDDEN * (HIDDEN + OUT_PAD),
        transcendentals=0,
        bytes_accessed=(Bp * HIDDEN * 4            # x read
                        + HIDDEN * HIDDEN * 2      # w1 (bf16)
                        + HIDDEN * OUT_PAD * 2     # w2 (bf16)
                        + (HIDDEN + OUT_PAD) * 4   # biases
                        + Bp * OUT_PAD * 4))       # out write

    out_padded = pl.pallas_call(
        _mlp_kernel,
        out_shape=jax.ShapeDtypeStruct((Bp, OUT_PAD), jnp.float32),
        grid_spec=pltpu.PrefetchScalarGridSpec(
            num_scalar_prefetch=0,
            grid=grid,
            in_specs=[
                pl.BlockSpec((TB, HIDDEN), lambda i: (i, 0)),       # x tile
                pl.BlockSpec((HIDDEN, HIDDEN), lambda i: (0, 0)),   # w1 resident
                pl.BlockSpec((1, HIDDEN), lambda i: (0, 0)),        # b1 resident
                pl.BlockSpec((HIDDEN, OUT_PAD), lambda i: (0, 0)),  # w2 resident
                pl.BlockSpec((1, OUT_PAD), lambda i: (0, 0)),       # b2 resident
            ],
            out_specs=pl.BlockSpec((TB, OUT_PAD), lambda i: (i, 0)),
        ),
        compiler_params=pltpu.CompilerParams(
            dimension_semantics=("parallel",),      # megacore on v7x; no-op on v5e/v6e
            vmem_limit_bytes=32 * 1024 * 1024,
        ),
        cost_estimate=cost,
    )(x, w1_bf, b1_f32, w2_pad, b2_pad)

    return out_padded[:B, :PRE_HORIZON]


def init_params(key):
    """Deterministic init mimicking PyTorch nn.Linear default (U[-1/sqrt(fan_in), +])."""
    k1, k2, k3, k4 = jax.random.split(key, 4)
    bound1 = 1.0 / jnp.sqrt(HIDDEN)
    # stored as (in, out) so the kernel computes x @ W
    w1 = jax.random.uniform(k1, (HIDDEN, HIDDEN), jnp.float32, -bound1, bound1)
    b1 = jax.random.uniform(k2, (1, HIDDEN), jnp.float32, -bound1, bound1)
    w2 = jax.random.uniform(k3, (HIDDEN, PRE_HORIZON), jnp.float32, -bound1, bound1)
    b2 = jax.random.uniform(k4, (1, PRE_HORIZON), jnp.float32, -bound1, bound1)
    return w1, b1, w2, b2


def reference_f32(x, w1, b1, w2, b2):
    h = x @ w1 + b1
    h = jnp.where(h >= 0, h, NEG_SLOPE * h)
    return h @ w2 + b2


def reference_bf16_operands(x, w1, b1, w2, b2):
    """Reference matching the kernel's numerics: bf16 dot operands, f32 accum."""
    h = jnp.dot(x.astype(jnp.bfloat16), w1.astype(jnp.bfloat16),
                preferred_element_type=jnp.float32) + b1
    h = jnp.maximum(h, NEG_SLOPE * h)
    return jnp.dot(h.astype(jnp.bfloat16), w2.astype(jnp.bfloat16),
                   preferred_element_type=jnp.float32) + b2


if __name__ == "__main__":
    key = jax.random.PRNGKey(0)
    kx, kp = jax.random.split(key)

    B = 8
    x = jax.random.normal(kx, (B, HIDDEN), jnp.float32)
    w1, b1, w2, b2 = init_params(kp)

    run = jax.jit(personal_out1)
    out = run(x, w1, b1, w2, b2)
    out = jax.block_until_ready(out)
    assert out.shape == (B, PRE_HORIZON)

    # Tight check vs. a reference with identical (bf16-operand) numerics.
    ref_bf = reference_bf16_operands(x, w1, b1, w2, b2)
    assert jnp.allclose(out, ref_bf, atol=1e-2, rtol=1e-2), "mismatch vs bf16 reference"

    # Loose sanity check vs. the pure-f32 PyTorch-equivalent reference.
    ref = reference_f32(x, w1, b1, w2, b2)
    assert jnp.allclose(out, ref, atol=5e-2, rtol=5e-2), "mismatch vs f32 reference"

    print("KERNEL_OK")
</pallas_src>

<mosaic_0001>
module attributes {stable_mosaic.version = 11 : i64} {
  func.func @_mlp_kernel(%arg0: i32, %arg1: memref<8x256xf32, #tpu.memory_space<vmem>>, %arg2: memref<256x256xbf16, #tpu.memory_space<vmem>>, %arg3: memref<1x256xf32, #tpu.memory_space<vmem>>, %arg4: memref<256x128xbf16, #tpu.memory_space<vmem>>, %arg5: memref<1x128xf32, #tpu.memory_space<vmem>>, %arg6: memref<8x128xf32, #tpu.memory_space<vmem>>) attributes {dimension_semantics = [#tpu.dimension_semantics<parallel>], iteration_bounds = array<i64: 1>, scalar_prefetch = 0 : i64, scratch_operands = 0 : i64, tpu.core_type = #tpu.core_type<tc>, window_params = [{transform_indices = @transform_0, window_bounds = array<i64: 8, 256>}, {pipeline_mode = #tpu.pipeline_mode<synchronous>, transform_indices = @transform_1, window_bounds = array<i64: 256, 256>}, {pipeline_mode = #tpu.pipeline_mode<synchronous>, transform_indices = @transform_2, window_bounds = array<i64: 1, 256>}, {pipeline_mode = #tpu.pipeline_mode<synchronous>, transform_indices = @transform_3, window_bounds = array<i64: 256, 128>}, {pipeline_mode = #tpu.pipeline_mode<synchronous>, transform_indices = @transform_4, window_bounds = array<i64: 1, 128>}, {transform_indices = @transform_5, window_bounds = array<i64: 8, 128>}]} {
    %c0 = arith.constant 0 : index
    %c0_0 = arith.constant 0 : index
    %0 = vector.load %arg1[%c0, %c0_0] : memref<8x256xf32, #tpu.memory_space<vmem>>, vector<8x256xf32>
    %1 = arith.truncf %0 : vector<8x256xf32> to vector<8x256xbf16>
    %c0_1 = arith.constant 0 : index
    %c0_2 = arith.constant 0 : index
    %2 = vector.load %arg2[%c0_1, %c0_2] : memref<256x256xbf16, #tpu.memory_space<vmem>>, vector<256x256xbf16>
    %cst = arith.constant dense<0.000000e+00> : vector<8x256xf32>
    %3 = tpu.matmul %1, %2, %cst {dimension_numbers = #tpu.dot_dimension_numbers<[1], [0], [0], [1], [0, 0, 1, 1], [], []>} : vector<8x256xbf16>, vector<256x256xbf16>, vector<8x256xf32> -> vector<8x256xf32>
    %c0_3 = arith.constant 0 : index
    %c0_4 = arith.constant 0 : index
    %4 = vector.load %arg3[%c0_3, %c0_4] : memref<1x256xf32, #tpu.memory_space<vmem>>, vector<1x256xf32>
    %5 = vector.broadcast %4 : vector<1x256xf32> to vector<8x256xf32>
    %6 = arith.addf %3, %5 : vector<8x256xf32>
    %cst_5 = arith.constant 0.00999999977 : f32
    %7 = vector.broadcast %cst_5 : f32 to vector<8x256xf32>
    %8 = arith.mulf %7, %6 : vector<8x256xf32>
    %9 = arith.maximumf %6, %8 : vector<8x256xf32>
    %10 = arith.truncf %9 : vector<8x256xf32> to vector<8x256xbf16>
    %c0_6 = arith.constant 0 : index
    %c0_7 = arith.constant 0 : index
    %11 = vector.load %arg4[%c0_6, %c0_7] : memref<256x128xbf16, #tpu.memory_space<vmem>>, vector<256x128xbf16>
    %cst_8 = arith.constant dense<0.000000e+00> : vector<8x128xf32>
    %12 = tpu.matmul %10, %11, %cst_8 {dimension_numbers = #tpu.dot_dimension_numbers<[1], [0], [0], [1], [0, 0, 1, 1], [], []>} : vector<8x256xbf16>, vector<256x128xbf16>, vector<8x128xf32> -> vector<8x128xf32>
    %c0_9 = arith.constant 0 : index
    %c0_10 = arith.constant 0 : index
    %13 = vector.load %arg5[%c0_9, %c0_10] : memref<1x128xf32, #tpu.memory_space<vmem>>, vector<1x128xf32>
    %14 = vector.broadcast %13 : vector<1x128xf32> to vector<8x128xf32>
    %15 = arith.addf %12, %14 : vector<8x128xf32>
    %c0_11 = arith.constant 0 : index
    %c0_12 = arith.constant 0 : index
    %16 = vector.load %arg6[%c0_11, %c0_12] : memref<8x128xf32, #tpu.memory_space<vmem>>, vector<8x128xf32>
    tpu.vector_store %arg6[%c0_11, %c0_12], %15 {strides = array<i32>} : memref<8x128xf32, #tpu.memory_space<vmem>>, vector<8x128xf32>,
    return
  }
  func.func @transform_0(%arg0: i32) -> (i32, i32) {
    %c0_i32 = arith.constant 0 : i32
    %c0_i32_0 = arith.constant 0 : i32
    return %arg0, %c0_i32 : i32, i32
  }
  func.func @transform_1(%arg0: i32) -> (i32, i32) {
    %c0_i32 = arith.constant 0 : i32
    %c0_i32_0 = arith.constant 0 : i32
    %c0_i32_1 = arith.constant 0 : i32
    return %c0_i32, %c0_i32_0 : i32, i32
  }
  func.func @transform_2(%arg0: i32) -> (i32, i32) {
    %c0_i32 = arith.constant 0 : i32
    %c0_i32_0 = arith.constant 0 : i32
    %c0_i32_1 = arith.constant 0 : i32
    return %c0_i32, %c0_i32_0 : i32, i32
  }
  func.func @transform_3(%arg0: i32) -> (i32, i32) {
    %c0_i32 = arith.constant 0 : i32
    %c0_i32_0 = arith.constant 0 : i32
    %c0_i32_1 = arith.constant 0 : i32
    return %c0_i32, %c0_i32_0 : i32, i32
  }
  func.func @transform_4(%arg0: i32) -> (i32, i32) {
    %c0_i32 = arith.constant 0 : i32
    %c0_i32_0 = arith.constant 0 : i32
    %c0_i32_1 = arith.constant 0 : i32
    return %c0_i32, %c0_i32_0 : i32, i32
  }
  func.func @transform_5(%arg0: i32) -> (i32, i32) {
    %c0_i32 = arith.constant 0 : i32
    %c0_i32_0 = arith.constant 0 : i32
    return %arg0, %c0_i32 : i32, i32
  }
}

</mosaic_0001>

<llo_original>
// kernel: personal_out1.1
$region0: #{personal_out1.1}
  #allocation0 [shape = 'u32[]', space=smem, size = 0x4, offset = 0x4, fixed_abs, tag = 'smem constant byte address 0x4 - core index']
  #allocation1 [shape = 'u32[144,128]{1,0:T(1,128)}', space=vmem, size = 0x12000, scoped, tag = 'internal scratch']
  %s0 = inlined_call_operand.vmem [shape: f32[8,256], index: 0, kind: input, shape index: {}]
  %s1 = inlined_call_operand.vmem [shape: bf16[256,256], index: 1, kind: input, shape index: {}]
  %s2 = inlined_call_operand.vmem [shape: f32[1,256], index: 2, kind: input, shape index: {}]
  %s3 = inlined_call_operand.vmem [shape: bf16[256,128], index: 3, kind: input, shape index: {}]
  %s4 = inlined_call_operand.vmem [shape: f32[1,128], index: 4, kind: input, shape index: {}]
  %s5 = inlined_call_operand.hbm [shape: f32[8,128], index: 5, kind: output, shape index: {}]
  %s6 = sld [smem:[#allocation0]]
  $region30: #{personal_out1.1} parent=0
    _
  %s8 = ssub.s32 1, %s6
  %s9 = scalar_select 0, %s8, %s6
  $region1: #{personal_out1.1} parent=0
    #allocation2 [shape = 'u8[4096]{0}', space=vmem, size = 0x1000, scoped, tag = 'output window, operand 0, single buffered']
    #allocation3 [shape = 's32[1]{0}', space=sflag, size = 0x4, scoped, tag = 'scoped memory for personal_out1.1']
    %10 = vsyncpa [#allocation3], 0
    // Predicated region
    $region2: #{personal_out1.1} parent=1 // pred_check
      _
    $region3: #{personal_out1.1} parent=1 // pred_check_branch
      %12 = sbr.rel (0) target = $region5
    $region4: #{personal_out1.1} parent=1 // pred_region
      _
    $region5: #{personal_out1.1} parent=1 // pred_fallthru
      _
    // Predicated region
    $region6: #{personal_out1.1} parent=1 // pred_check
      _
    $region7: #{personal_out1.1} parent=1 // pred_check_branch
      %14 = sbr.rel (0) target = $region9
    $region8: #{personal_out1.1} parent=1 // pred_region
      _
    $region9: #{personal_out1.1} parent=1 // pred_fallthru
      _
    // Predicated region
    $region10: #{personal_out1.1} parent=1 // pred_check
      _
    $region11: #{personal_out1.1} parent=1 // pred_check_branch
      %16 = sbr.rel (0) target = $region13
    $region12: #{personal_out1.1} parent=1 // pred_region
      _
    $region13: #{personal_out1.1} parent=1 // pred_fallthru
      _
    // Predicated region
    $region14: #{personal_out1.1} parent=1 // pred_check
      _
    $region15: #{personal_out1.1} parent=1 // pred_check_branch
      %18 = sbr.rel (0) target = $region17
    $region16: #{personal_out1.1} parent=1 // pred_region
      _
    $region17: #{personal_out1.1} parent=1 // pred_fallthru
      _
    // Predicated region
    $region18: #{personal_out1.1} parent=1 // pred_check
      _
    $region19: #{personal_out1.1} parent=1 // pred_check_branch
      %20 = sbr.rel (0) target = $region21
    $region20: #{personal_out1.1} parent=1 // pred_region
      _
    $region21: #{personal_out1.1} parent=1 // pred_fallthru
      _
    %v22 = vld [vmem:[%s0] sm:$0xff]
    %v23 = vld [vmem:[%s0 + $0x8] sm:$0xff]
    %v24 = vpack.c.bf16 %v22, %v22
    %v25 = vpack.c.bf16 %v23, %v23
    %v26 = vld [vmem:[%s1] sm:$0xff]
    %v27 = vld [vmem:[%s1 + $0x8] sm:$0xff]
    %v28 = vld [vmem:[%s1 + $0x10] sm:$0xff]
    %v29 = vld [vmem:[%s1 + $0x18] sm:$0xff]
    %v30 = vld [vmem:[%s1 + $0x20] sm:$0xff]
    %v31 = vld [vmem:[%s1 + $0x28] sm:$0xff]
    %v32 = vld [vmem:[%s1 + $0x30] sm:$0xff]
    %v33 = vld [vmem:[%s1 + $0x38] sm:$0xff]
    %v34 = vld [vmem:[%s1 + $0x40] sm:$0xff]
    %v35 = vld [vmem:[%s1 + $0x48] sm:$0xff]
    %v36 = vld [vmem:[%s1 + $0x50] sm:$0xff]
    %v37 = vld [vmem:[%s1 + $0x58] sm:$0xff]
    %v38 = vld [vmem:[%s1 + $0x60] sm:$0xff]
    %v39 = vld [vmem:[%s1 + $0x68] sm:$0xff]
    %v40 = vld [vmem:[%s1 + $0x70] sm:$0xff]
    %v41 = vld [vmem:[%s1 + $0x78] sm:$0xff]
    %v42 = vld [vmem:[%s1 + $0x80] sm:$0xff]
    %v43 = vld [vmem:[%s1 + $0x88] sm:$0xff]
    %v44 = vld [vmem:[%s1 + $0x90] sm:$0xff]
    %v45 = vld [vmem:[%s1 + $0x98] sm:$0xff]
    %v46 = vld [vmem:[%s1 + $0xa0] sm:$0xff]
    %v47 = vld [vmem:[%s1 + $0xa8] sm:$0xff]
    %v48 = vld [vmem:[%s1 + $0xb0] sm:$0xff]
    %v49 = vld [vmem:[%s1 + $0xb8] sm:$0xff]
    %v50 = vld [vmem:[%s1 + $0xc0] sm:$0xff]
    %v51 = vld [vmem:[%s1 + $0xc8] sm:$0xff]
    %v52 = vld [vmem:[%s1 + $0xd0] sm:$0xff]
    %v53 = vld [vmem:[%s1 + $0xd8] sm:$0xff]
    %v54 = vld [vmem:[%s1 + $0xe0] sm:$0xff]
    %v55 = vld [vmem:[%s1 + $0xe8] sm:$0xff]
    %v56 = vld [vmem:[%s1 + $0xf0] sm:$0xff]
    %v57 = vld [vmem:[%s1 + $0xf8] sm:$0xff]
    %v58 = vld [vmem:[%s2] sm:$0x3]
    %v60 = vlaneseq
    %v61 = vshrl.u32 %v60, 7
    %v62 = vsub.s32 0, %v61
    %v63 = vrot.slane %v58, %v62
    %v64 = vlaneseq
    %v65 = vshrl.u32 %v64, 7
    %v66 = vsub.s32 1, %v65
    %v67 = vrot.slane %v58, %v66
    %v102 = vunpack.c.l.b16 %v26
    %v103 = vunpack.c.h.b16 %v26
    %v104 = vunpack.c.l.b16 %v27
    %v105 = vunpack.c.h.b16 %v27
    %v106 = vunpack.c.l.b16 %v28
    %v107 = vunpack.c.h.b16 %v28
    %v108 = vunpack.c.l.b16 %v29
    %v109 = vunpack.c.h.b16 %v29
    %v110 = vunpack.c.l.b16 %v30
    %v111 = vunpack.c.h.b16 %v30
    %v112 = vunpack.c.l.b16 %v31
    %v113 = vunpack.c.h.b16 %v31
    %v114 = vunpack.c.l.b16 %v32
    %v115 = vunpack.c.h.b16 %v32
    %v116 = vunpack.c.l.b16 %v33
    %v117 = vunpack.c.h.b16 %v33
    %v118 = vunpack.c.l.b16 %v34
    %v119 = vunpack.c.h.b16 %v34
    %v120 = vunpack.c.l.b16 %v35
    %v121 = vunpack.c.h.b16 %v35
    %v122 = vunpack.c.l.b16 %v36
    %v123 = vunpack.c.h.b16 %v36
    %v124 = vunpack.c.l.b16 %v37
    %v125 = vunpack.c.h.b16 %v37
    %v126 = vunpack.c.l.b16 %v38
    %v127 = vunpack.c.h.b16 %v38
    %v128 = vunpack.c.l.b16 %v39
    %v129 = vunpack.c.h.b16 %v39
    %v130 = vunpack.c.l.b16 %v40
    %v131 = vunpack.c.h.b16 %v40
    %v132 = vunpack.c.l.b16 %v41
    %v133 = vunpack.c.h.b16 %v41
    %v134 = vunpack.c.l.b16 %v42
    %v135 = vunpack.c.h.b16 %v42
    %v136 = vunpack.c.l.b16 %v43
    %v137 = vunpack.c.h.b16 %v43
    %v138 = vunpack.c.l.b16 %v44
    %v139 = vunpack.c.h.b16 %v44
    %v140 = vunpack.c.l.b16 %v45
    %v141 = vunpack.c.h.b16 %v45
    %v142 = vunpack.c.l.b16 %v46
    %v143 = vunpack.c.h.b16 %v46
    %v144 = vunpack.c.l.b16 %v47
    %v145 = vunpack.c.h.b16 %v47
    %v146 = vunpack.c.l.b16 %v48
    %v147 = vunpack.c.h.b16 %v48
    %v148 = vunpack.c.l.b16 %v49
    %v149 = vunpack.c.h.b16 %v49
    %v150 = vunpack.c.l.b16 %v50
    %v151 = vunpack.c.h.b16 %v50
    %v152 = vunpack.c.l.b16 %v51
    %v153 = vunpack.c.h.b16 %v51
    %v154 = vunpack.c.l.b16 %v52
    %v155 = vunpack.c.h.b16 %v52
    %v156 = vunpack.c.l.b16 %v53
    %v157 = vunpack.c.h.b16 %v53
    %v158 = vunpack.c.l.b16 %v54
    %v159 = vunpack.c.h.b16 %v54
    %v160 = vunpack.c.l.b16 %v55
    %v161 = vunpack.c.h.b16 %v55
    %v162 = vunpack.c.l.b16 %v56
    %v163 = vunpack.c.h.b16 %v56
    %v164 = vunpack.c.l.b16 %v57
    %v165 = vunpack.c.h.b16 %v57
    %v166 = vpack.c.b16 %v104, %v102
    %v167 = vpack.c.b16 %v105, %v103
    %v168 = vpack.c.b16 %v108, %v106
    %v169 = vpack.c.b16 %v109, %v107
    %v170 = vpack.c.b16 %v112, %v110
    %v171 = vpack.c.b16 %v113, %v111
    %v172 = vpack.c.b16 %v116, %v114
    %v173 = vpack.c.b16 %v117, %v115
    %v174 = vpack.c.b16 %v120, %v118
    %v175 = vpack.c.b16 %v121, %v119
    %v176 = vpack.c.b16 %v124, %v122
    %v177 = vpack.c.b16 %v125, %v123
    %v178 = vpack.c.b16 %v128, %v126
    %v179 = vpack.c.b16 %v129, %v127
    %v180 = vpack.c.b16 %v132, %v130
    %v181 = vpack.c.b16 %v133, %v131
    %v182 = vpack.c.b16 %v136, %v134
    %v183 = vpack.c.b16 %v137, %v135
    %v184 = vpack.c.b16 %v140, %v138
    %v185 = vpack.c.b16 %v141, %v139
    %v186 = vpack.c.b16 %v144, %v142
    %v187 = vpack.c.b16 %v145, %v143
    %v188 = vpack.c.b16 %v148, %v146
    %v189 = vpack.c.b16 %v149, %v147
    %v190 = vpack.c.b16 %v152, %v150
    %v191 = vpack.c.b16 %v153, %v151
    %v192 = vpack.c.b16 %v156, %v154
    %v193 = vpack.c.b16 %v157, %v155
    %v194 = vpack.c.b16 %v160, %v158
    %v195 = vpack.c.b16 %v161, %v159
    %v196 = vpack.c.b16 %v164, %v162
    %v197 = vpack.c.b16 %v165, %v163
    %230 = vmatprep.subr.bf16.mxu0 %v167
    %231 = vmatpush1.bf16.msra.mxu0 %v166
    %232 = vmatprep.subr.bf16.mxu0 %v169
    %233 = vmatpush1.bf16.msra.mxu0 %v168
    %234 = vmatprep.subr.bf16.mxu0 %v171
    %235 = vmatpush1.bf16.msra.mxu0 %v170
    %236 = vmatprep.subr.bf16.mxu0 %v173
    %237 = vmatpush1.bf16.msra.mxu0 %v172
    %238 = vmatprep.subr.bf16.mxu0 %v175
    %239 = vmatpush1.bf16.msra.mxu0 %v174
    %240 = vmatprep.subr.bf16.mxu0 %v177
    %241 = vmatpush1.bf16.msra.mxu0 %v176
    %242 = vmatprep.subr.bf16.mxu0 %v179
    %243 = vmatpush1.bf16.msra.mxu0 %v178
    %244 = vmatprep.subr.bf16.mxu0 %v181
    %245 = vmatpush1.bf16.msra.mxu0 %v180
    %246 = vmatprep.subr.bf16.mxu0 %v183
    %247 = vmatpush1.bf16.msra.mxu0 %v182
    %248 = vmatprep.subr.bf16.mxu0 %v185
    %249 = vmatpush1.bf16.msra.mxu0 %v184
    %250 = vmatprep.subr.bf16.mxu0 %v187
    %251 = vmatpush1.bf16.msra.mxu0 %v186
    %252 = vmatprep.subr.bf16.mxu0 %v189
    %253 = vmatpush1.bf16.msra.mxu0 %v188
    %254 = vmatprep.subr.bf16.mxu0 %v191
    %255 = vmatpush1.bf16.msra.mxu0 %v190
    %256 = vmatprep.subr.bf16.mxu0 %v193
    %257 = vmatpush1.bf16.msra.mxu0 %v192
    %258 = vmatprep.subr.bf16.mxu0 %v195
    %259 = vmatpush1.bf16.msra.mxu0 %v194
    %260 = vmatprep.subr.bf16.mxu0 %v197
    %261 = vmatpush1.bf16.msra.mxu0 %v196
    %262 = vmatprep.mubr.bf16.mxu0 %v25
    %263 = vmatmul.mubr.bf16.gmra.mrb[0].mxu0 %v24
    %v264 = vpop.f32.mrb[0].mxu0
    %v265 = vadd.f32 %v63, %v264
    %v266 = vpop.f32.mrb[0].mxu0
    %v267 = vadd.f32 %v67, %v266
    %v268 = vpop.f32.mrb[0].mxu0
    %v269 = vpop.f32.mrb[0].mxu0
    %270 = vdwg.mxu0
    %v271 = vmul.f32 %v265, 0.01
    %v272 = vmul.f32 %v267, 0.01
    %v273 = vmax.f32 %v265, %v271
    %v274 = vmax.f32 %v267, %v272
    %v275 = vpack.c.bf16 %v273, %v273
    %v276 = vpack.c.bf16 %v274, %v274
    %v277 = vld [vmem:[%s3] sm:$0xf]
    %v278 = vld [vmem:[%s3 + $0x4] sm:$0xf]
    %v279 = vld [vmem:[%s3 + $0x8] sm:$0xf]
    %v280 = vld [vmem:[%s3 + $0xc] sm:$0xf]
    %v281 = vld [vmem:[%s3 + $0x10] sm:$0xf]
    %v282 = vld [vmem:[%s3 + $0x14] sm:$0xf]
    %v283 = vld [vmem:[%s3 + $0x18] sm:$0xf]
    %v284 = vld [vmem:[%s3 + $0x1c] sm:$0xf]
    %v285 = vld [vmem:[%s3 + $0x20] sm:$0xf]
    %v286 = vld [vmem:[%s3 + $0x24] sm:$0xf]
    %v287 = vld [vmem:[%s3 + $0x28] sm:$0xf]
    %v288 = vld [vmem:[%s3 + $0x2c] sm:$0xf]
    %v289 = vld [vmem:[%s3 + $0x30] sm:$0xf]
    %v290 = vld [vmem:[%s3 + $0x34] sm:$0xf]
    %v291 = vld [vmem:[%s3 + $0x38] sm:$0xf]
    %v292 = vld [vmem:[%s3 + $0x3c] sm:$0xf]
    %v293 = vld [vmem:[%s3 + $0x40] sm:$0xf]
    %v294 = vld [vmem:[%s3 + $0x44] sm:$0xf]
    %v295 = vld [vmem:[%s3 + $0x48] sm:$0xf]
    %v296 = vld [vmem:[%s3 + $0x4c] sm:$0xf]
    %v297 = vld [vmem:[%s3 + $0x50] sm:$0xf]
    %v298 = vld [vmem:[%s3 + $0x54] sm:$0xf]
    %v299 = vld [vmem:[%s3 + $0x58] sm:$0xf]
    %v300 = vld [vmem:[%s3 + $0x5c] sm:$0xf]
    %v301 = vld [vmem:[%s3 + $0x60] sm:$0xf]
    %v302 = vld [vmem:[%s3 + $0x64] sm:$0xf]
    %v303 = vld [vmem:[%s3 + $0x68] sm:$0xf]
    %v304 = vld [vmem:[%s3 + $0x6c] sm:$0xf]
    %v305 = vld [vmem:[%s3 + $0x70] sm:$0xf]
    %v306 = vld [vmem:[%s3 + $0x74] sm:$0xf]
    %v307 = vld [vmem:[%s3 + $0x78] sm:$0xf]
    %v308 = vld [vmem:[%s3 + $0x7c] sm:$0xf]
    %v309 = vld [vmem:[%s4] sm:$0x1]
    %v311 = vlaneseq
    %v312 = vshrl.u32 %v311, 7
    %v313 = vsub.s32 0, %v312
    %v314 = vrot.slane %v309, %v313
    %v348 = vunpack.c.l.b16 %v277
    %v349 = vunpack.c.l.b16 %v278
    %v350 = vunpack.c.l.b16 %v279
    %v351 = vunpack.c.l.b16 %v280
    %v352 = vunpack.c.l.b16 %v281
    %v353 = vunpack.c.l.b16 %v282
    %v354 = vunpack.c.l.b16 %v283
    %v355 = vunpack.c.l.b16 %v284
    %v356 = vunpack.c.l.b16 %v285
    %v357 = vunpack.c.l.b16 %v286
    %v358 = vunpack.c.l.b16 %v287
    %v359 = vunpack.c.l.b16 %v288
    %v360 = vunpack.c.l.b16 %v289
    %v361 = vunpack.c.l.b16 %v290
    %v362 = vunpack.c.l.b16 %v291
    %v363 = vunpack.c.l.b16 %v292
    %v364 = vunpack.c.l.b16 %v293
    %v365 = vunpack.c.l.b16 %v294
    %v366 = vunpack.c.l.b16 %v295
    %v367 = vunpack.c.l.b16 %v296
    %v368 = vunpack.c.l.b16 %v297
    %v369 = vunpack.c.l.b16 %v298
    %v370 = vunpack.c.l.b16 %v299
    %v371 = vunpack.c.l.b16 %v300
    %v372 = vunpack.c.l.b16 %v301
    %v373 = vunpack.c.l.b16 %v302
    %v374 = vunpack.c.l.b16 %v303
    %v375 = vunpack.c.l.b16 %v304
    %v376 = vunpack.c.l.b16 %v305
    %v377 = vunpack.c.l.b16 %v306
    %v378 = vunpack.c.l.b16 %v307
    %v379 = vunpack.c.l.b16 %v308
    %v380 = vpack.c.b16 %v349, %v348
    %v381 = vpack.c.b16 %v351, %v350
    %v382 = vpack.c.b16 %v353, %v352
    %v383 = vpack.c.b16 %v355, %v354
    %v384 = vpack.c.b16 %v357, %v356
    %v385 = vpack.c.b16 %v359, %v358
    %v386 = vpack.c.b16 %v361, %v360
    %v387 = vpack.c.b16 %v363, %v362
    %v388 = vpack.c.b16 %v365, %v364
    %v389 = vpack.c.b16 %v367, %v366
    %v390 = vpack.c.b16 %v369, %v368
    %v391 = vpack.c.b16 %v371, %v370
    %v392 = vpack.c.b16 %v373, %v372
    %v393 = vpack.c.b16 %v375, %v374
    %v394 = vpack.c.b16 %v377, %v376
    %v395 = vpack.c.b16 %v379, %v378
    %412 = vmatprep.subr.bf16.mxu0 0
    %413 = vmatpush1.bf16.msra.mxu0 %v380
    %414 = vmatprep.subr.bf16.mxu0 0
    %415 = vmatpush1.bf16.msra.mxu0 %v381
    %416 = vmatprep.subr.bf16.mxu0 0
    %417 = vmatpush1.bf16.msra.mxu0 %v382
    %418 = vmatprep.subr.bf16.mxu0 0
    %419 = vmatpush1.bf16.msra.mxu0 %v383
    %420 = vmatprep.subr.bf16.mxu0 0
    %421 = vmatpush1.bf16.msra.mxu0 %v384
    %422 = vmatprep.subr.bf16.mxu0 0
    %423 = vmatpush1.bf16.msra.mxu0 %v385
    %424 = vmatprep.subr.bf16.mxu0 0
    %425 = vmatpush1.bf16.msra.mxu0 %v386
    %426 = vmatprep.subr.bf16.mxu0 0
    %427 = vmatpush1.bf16.msra.mxu0 %v387
    %428 = vmatprep.subr.bf16.mxu0 0
    %429 = vmatpush1.bf16.msra.mxu0 %v388
    %430 = vmatprep.subr.bf16.mxu0 0
    %431 = vmatpush1.bf16.msra.mxu0 %v389
    %432 = vmatprep.subr.bf16.mxu0 0
    %433 = vmatpush1.bf16.msra.mxu0 %v390
    %434 = vmatprep.subr.bf16.mxu0 0
    %435 = vmatpush1.bf16.msra.mxu0 %v391
    %436 = vmatprep.subr.bf16.mxu0 0
    %437 = vmatpush1.bf16.msra.mxu0 %v392
    %438 = vmatprep.subr.bf16.mxu0 0
    %439 = vmatpush1.bf16.msra.mxu0 %v393
    %440 = vmatprep.subr.bf16.mxu0 0
    %441 = vmatpush1.bf16.msra.mxu0 %v394
    %442 = vmatprep.subr.bf16.mxu0 0
    %443 = vmatpush1.bf16.msra.mxu0 %v395
    %444 = vmatprep.mubr.bf16.mxu0 %v276
    %445 = vmatmul.mubr.bf16.gmra.mrb[0].mxu0 %v275
    %v446 = vpop.f32.mrb[0].mxu0
    %v447 = vadd.f32 %v314, %v446
    %v448 = vpop.f32.mrb[0].mxu0
    %v449 = vpop.f32.mrb[0].mxu0
    %v450 = vpop.f32.mrb[0].mxu0
    %451 = vdwg.mxu0
    %452 = vst [vmem:[#allocation2] sm:$0xff] %v447
    // Predicated region
    $region22: #{personal_out1.1} parent=1 // pred_check
      _
    $region23: #{personal_out1.1} parent=1 // pred_check_branch
      %454 = sbr.rel (0) target = $region25
    $region24: #{personal_out1.1} parent=1 // pred_region
      %s456 = ssub.s32 128, 128
      %457 = vsyncadd [#allocation3], %s456
      %s459 = sshll.u32 [#allocation2], 4
      %s460 = int_to_ptr.vmem [resolvable:$true] %s459
      %462 = dma.vmem_to_hbm [thread:$0]  %s460, 128, %s5, [#allocation3]
    $region25: #{personal_out1.1} parent=1 // pred_fallthru
      _
    // Predicated region
    $region26: #{personal_out1.1} parent=1 // pred_check
      _
    $region27: #{personal_out1.1} parent=1 // pred_check_branch
      %464 = sbr.rel (0) target = $region29
    $region28: #{personal_out1.1} parent=1 // pred_region
      %465 = dma.done [#allocation3], 128
    $region29: #{personal_out1.1} parent=1 // pred_fallthru
      _
    %466 = vsyncpa [#allocation3], 1

</llo_original>
